<compile_context>
chip_gen: v7x
topology: tpu7x:2x2x1
jax: 0.10.0
libtpu: 0.0.40
codegen_flags: <defaults>
</compile_context>

<pallas_src>
import jax
import jax.numpy as jnp
from jax.experimental import pallas as pl
from jax.experimental.pallas import tpu as pltpu


def _identity_copy_kernel(x_ref, o_ref):
    # Pure pass-through: load the VMEM tile and store it to the output tile.
    o_ref[...] = x_ref[...]


def _cdiv(a: int, b: int) -> int:
    return -(-a // b)


# ~8 MiB per tile buffer: sweet spot for v7x (64 MiB VMEM, 3.2 TB/s HBM) and
# comfortably within v5e/v6e limits with Pallas' double buffering.
_TARGET_TILE_BYTES = 8 << 20


def _choose_layout(total: int, dtype_bytes: int):
    """Pick (width, rows, row_tile, grid_rows) for a lane-dense copy.

    Returns None when the element count is not a multiple of 128 -- the caller
    then skips the kernel entirely (no padding, no extra HBM passes).
    """
    if total % 128 != 0:
        return None

    # Widest lane-dense last dim (multiple of 128) that divides `total`
    # exactly, so stores are full-width unmasked vst and no padding is needed.
    width = 128
    for w in (8192, 4096, 2048, 1024, 512, 256, 128):
        if total % w == 0:
            width = w
            break
    rows = total // width

    # Sublane multiple for full-vreg tiles, per dtype packing.
    sublane = {1: 32, 2: 16}.get(dtype_bytes, 8)
    target_rows = max(sublane, _TARGET_TILE_BYTES // (width * dtype_bytes))

    if rows <= target_rows:
        # Whole slab is a single block (block dims equal to the full array
        # dims are always legal, regardless of the (8,128) rule).
        row_tile = rows
    else:
        # Sublane-aligned tile near the ~8 MiB target.  The last grid block
        # may be ragged; Pallas masks partial tail blocks -- no padding needed.
        row_tile = (target_rows // sublane) * sublane

    grid_rows = _cdiv(rows, row_tile)
    return width, rows, row_tile, grid_rows


def _pallas_identity_copy(x: jax.Array) -> jax.Array:
    """Identity via an explicit Pallas copy kernel (1 HBM read + 1 HBM write)."""
    orig_shape = x.shape
    total = x.size
    if total == 0:
        return x

    dtype_bytes = jnp.dtype(x.dtype).itemsize
    layout = _choose_layout(total, dtype_bytes)
    if layout is None:
        # Awkward shape: padding/slicing would cost extra full-array HBM
        # passes, which is worse than simply returning the input.
        return x
    width, rows, row_tile, grid_rows = layout

    x2d = x.reshape(rows, width)

    tile_bytes = row_tile * width * dtype_bytes
    # 2 double-buffered copies of (in + out) tiles + headroom; floored above
    # every generation's scoped-VMEM default, still well under 64 MiB physical
    # on v7x (4 * 8 MiB + 2 MiB = 34 MiB).
    vmem_limit = max(32 << 20, 4 * tile_bytes + (2 << 20))

    y2d = pl.pallas_call(
        _identity_copy_kernel,
        out_shape=jax.ShapeDtypeStruct((rows, width), x.dtype),
        grid_spec=pltpu.PrefetchScalarGridSpec(
            num_scalar_prefetch=0,
            grid=(grid_rows,),
            in_specs=[pl.BlockSpec((row_tile, width), lambda i: (i, 0))],
            out_specs=pl.BlockSpec((row_tile, width), lambda i: (i, 0)),
        ),
        # NOTE: intentionally no input_output_aliases -- aliasing a non-donated
        # jit parameter forces a defensive full-array copy and doubles traffic.
        compiler_params=pltpu.CompilerParams(
            # On v7x, pltpu.CORE_PARALLEL here shards the row grid across both
            # TensorCores; "parallel" is kept for guaranteed portability across
            # v5e/v6e/v7x (single-TC chips).
            dimension_semantics=("parallel",),
            vmem_limit_bytes=vmem_limit,
        ),
    )(x2d)

    return y2d.reshape(orig_shape)


def clean_channel_forward(x: jax.Array) -> jax.Array:
    """Forward pass of CleanChannel: y == x.

    The optimal realization is the short-circuit `return x` (zero HBM traffic,
    zero dispatch).  This is the default module behaviour.
    """
    return x


class CleanChannelPallas:
    """Mirror of the PyTorch CleanChannel module (no parameters).

    By default the forward pass is a pure short-circuit (`return x`).  Passing
    use_pallas=True routes the data through the tuned Pallas copy kernel, kept
    only for API symmetry / validation.
    """

    def __init__(self, use_pallas: bool = False):
        self._use_pallas = use_pallas
        self._pallas_copy = jax.jit(_pallas_identity_copy)

    def __call__(self, x):
        if not self._use_pallas:
            return clean_channel_forward(x)  # identity: no kernel launch
        return self._pallas_copy(x)

    def set_noise(self, v):
        pass  # no-op, matching the PyTorch module


if __name__ == "__main__":
    key = jax.random.PRNGKey(0)
    # NCHW input consistent with the PyTorch module's typical usage:
    # (batch=2, C=4, H=16, W=16).
    x = jax.random.normal(key, (2, 4, 16, 16), dtype=jnp.float32)

    # Default (optimal) path: pure identity, no kernel launch.
    model = CleanChannelPallas()
    y_fast = model(x)
    y_fast = jax.block_until_ready(y_fast)
    assert y_fast.shape == x.shape and y_fast.dtype == x.dtype
    assert bool(jnp.array_equal(y_fast, x))

    # Explicit Pallas path (API symmetry / validation): run the kernel once.
    model_pallas = CleanChannelPallas(use_pallas=True)
    y_pallas = model_pallas(x)
    y_pallas = jax.block_until_ready(y_pallas)
    assert y_pallas.shape == x.shape and y_pallas.dtype == x.dtype
    assert bool(jnp.array_equal(y_pallas, x))

    print("KERNEL_OK")
</pallas_src>

<mosaic_0001>
module attributes {stable_mosaic.version = 11 : i64} {
  func.func @_identity_copy_kernel(%arg0: i32, %arg1: memref<1x2048xf32, #tpu.memory_space<vmem>>, %arg2: memref<1x2048xf32, #tpu.memory_space<vmem>>) attributes {dimension_semantics = [#tpu.dimension_semantics<parallel>], iteration_bounds = array<i64: 1>, scalar_prefetch = 0 : i64, scratch_operands = 0 : i64, tpu.core_type = #tpu.core_type<tc>, window_params = [{transform_indices = @transform_0, window_bounds = array<i64: 1, 2048>}, {transform_indices = @transform_1, window_bounds = array<i64: 1, 2048>}]} {
    %c0 = arith.constant 0 : index
    %c0_0 = arith.constant 0 : index
    %0 = vector.load %arg1[%c0, %c0_0] : memref<1x2048xf32, #tpu.memory_space<vmem>>, vector<1x2048xf32>
    %c0_1 = arith.constant 0 : index
    %c0_2 = arith.constant 0 : index
    %1 = vector.load %arg2[%c0_1, %c0_2] : memref<1x2048xf32, #tpu.memory_space<vmem>>, vector<1x2048xf32>
    tpu.vector_store %arg2[%c0_1, %c0_2], %0 {strides = array<i32>} : memref<1x2048xf32, #tpu.memory_space<vmem>>, vector<1x2048xf32>,
    return
  }
  func.func @transform_0(%arg0: i32) -> (i32, i32) {
    %c0_i32 = arith.constant 0 : i32
    %c0_i32_0 = arith.constant 0 : i32
    return %arg0, %c0_i32 : i32, i32
  }
  func.func @transform_1(%arg0: i32) -> (i32, i32) {
    %c0_i32 = arith.constant 0 : i32
    %c0_i32_0 = arith.constant 0 : i32
    return %arg0, %c0_i32 : i32, i32
  }
}

</mosaic_0001>

<llo_original>
// kernel: _pallas_identity_copy.1
$region0: #{_pallas_identity_copy.1}
  #allocation0 [shape = 'u32[]', space=smem, size = 0x4, offset = 0x4, fixed_abs, tag = 'smem constant byte address 0x4 - core index']
  #allocation1 [shape = 'u32[144,128]{1,0:T(1,128)}', space=vmem, size = 0x12000, scoped, tag = 'internal scratch']
  %s0 = inlined_call_operand.vmem [shape: f32[1,2048], index: 0, kind: input, shape index: {}]
  %s1 = inlined_call_operand.vmem [shape: f32[1,2048], index: 1, kind: output, shape index: {}]
  %s2 = sld [smem:[#allocation0]]
  $region14: #{_pallas_identity_copy.1} parent=0
    _
  %s4 = ssub.s32 1, %s2
  %s5 = scalar_select 0, %s4, %s2
  // Predicated region
  $region2: #{_pallas_identity_copy.1} parent=0 // pred_check
    _
  $region3: #{_pallas_identity_copy.1} parent=0 // pred_check_branch
    %7 = sbr.rel (0) target = $region5
  $region4: #{_pallas_identity_copy.1} parent=0 // pred_region
    _
  $region5: #{_pallas_identity_copy.1} parent=0 // pred_fallthru
    _
  %v8 = vld [vmem:[%s0] sm:$0xff]
  %v9 = vld [vmem:[%s0 + $0x8] sm:$0xff]
  %10 = vst [vmem:[%s1] sm:$0xff] %v8
  %11 = vst [vmem:[%s1 + $0x8] sm:$0xff] %v9
  // Predicated region
  $region6: #{_pallas_identity_copy.1} parent=0 // pred_check
    _
  $region7: #{_pallas_identity_copy.1} parent=0 // pred_check_branch
    %13 = sbr.rel (0) target = $region9
  $region8: #{_pallas_identity_copy.1} parent=0 // pred_region
    _
  $region9: #{_pallas_identity_copy.1} parent=0 // pred_fallthru
    _
  // Predicated region
  $region10: #{_pallas_identity_copy.1} parent=0 // pred_check
    _
  $region11: #{_pallas_identity_copy.1} parent=0 // pred_check_branch
    %15 = sbr.rel (0) target = $region13
  $region12: #{_pallas_identity_copy.1} parent=0 // pred_region
    _
  $region13: #{_pallas_identity_copy.1} parent=0 // pred_fallthru
    _

</llo_original>
